<compile_context>
chip_gen: v6e
topology: v6e:2x2x1
jax: 0.10.0
libtpu: 0.0.40
codegen_flags: <defaults>
</compile_context>

<pallas_src>
import jax
import jax.numpy as jnp
from jax.experimental import pallas as pl
from jax.experimental.pallas import tpu as pltpu

_P = 128  # padded lane width for all hidden features


def _generator_kernel(inp_ref, w_ref, b_ref, out_ref):
    P = _P
    KI = w_ref.shape[0] - 3 * P          # 16*dim (embed K)
    bf16 = jnp.bfloat16

    x = inp_ref[...]                     # (tile_b, 16*dim) bf16

    def mm(a, w):
        # bf16 operands, f32 accumulation on the MXU.
        return jnp.dot(a, w, preferred_element_type=jnp.float32)

    # Fused embed: one matmul produces [embed1 | skip | 0pad | embed2 | 0pad].
    he = mm(x, w_ref[0:KI, :]) + b_ref[:, 0:2 * P]        # (tile_b, 2P) f32
    h1 = he[:, 0:P]                                       # lane-128-aligned split
    h2 = he[:, P:2 * P]

    def residual(h, w, b):
        # Residual(n): x + relu(Linear(n, n)(x)); elementwise path stays f32.
        # Zero-padded weight rows/cols + zero bias preserve the skip/pad lanes.
        pre = mm(h.astype(bf16), w) + b
        return h + jax.nn.relu(pre)

    # layers1
    h1 = residual(h1, w_ref[KI:KI + P, 0:P],       b_ref[:, 2 * P:3 * P])
    h1 = residual(h1, w_ref[KI:KI + P, P:2 * P],   b_ref[:, 3 * P:4 * P])

    # sum branches, then layers2 (skip lanes: 0 + skip = skip, then preserved)
    h = h2 + h1
    h = residual(h, w_ref[KI + P:KI + 2 * P, 0:P],     b_ref[:, 4 * P:5 * P])
    h = residual(h, w_ref[KI + P:KI + 2 * P, P:2 * P], b_ref[:, 5 * P:6 * P])

    # readout: padded W_ro carries an identity block that re-adds the skip lanes.
    out = mm(h.astype(bf16), w_ref[KI + 2 * P:KI + 3 * P, 0:P]) + b_ref[:, 6 * P:7 * P]
    out_ref[...] = out                                   # lane-dense (tile_b, 128) store


def generator_forward(noise, x0, kparams, *, tile_b=None):
    """noise: (B, 15*dim) f32, x0: (B, dim) f32, kparams from prepare_params()."""
    B, dim = x0.shape
    assert noise.shape == (B, 15 * dim), "noise must have 15*dim features"
    P = _P

    if tile_b is None:
        tile_b = B if B <= 2048 else 2048        # few grid steps; tiles are tiny
    assert B % tile_b == 0 and (tile_b % 8 == 0 or tile_b == B), \
        "batch must be a multiple of tile_b, tile_b a multiple of 8"

    # Single streamed activation input; concat fuses with the mandatory bf16 cast,
    # so streaming bf16 halves input DMA bytes at no extra HBM pass.
    inp = jnp.concatenate([noise, x0], axis=-1).astype(jnp.bfloat16)   # (B, 16*dim)

    w_slab = kparams["w_slab"]        # (16*dim + 3*128, 256) bf16 — all weights
    b_slab = kparams["b_slab"]        # (1, 7*128) f32           — all biases

    out_pad = pl.pallas_call(
        _generator_kernel,
        out_shape=jax.ShapeDtypeStruct((B, P), jnp.float32),
        grid=(B // tile_b,),
        in_specs=[
            pl.BlockSpec((tile_b, inp.shape[1]), lambda i: (i, 0)),   # streamed
            pl.BlockSpec(w_slab.shape, lambda i: (0, 0)),             # VMEM-resident
            pl.BlockSpec(b_slab.shape, lambda i: (0, 0)),             # VMEM-resident
        ],
        out_specs=pl.BlockSpec((tile_b, P), lambda i: (i, 0)),
        compiler_params=pltpu.CompilerParams(
            dimension_semantics=("parallel",),      # v7x: split large batches over 2 TCs
            vmem_limit_bytes=32 * 1024 * 1024,      # explicit; far under v7x 64 MiB
        ),
    )(inp, w_slab, b_slab)

    return out_pad[:, :dim]


def prepare_params(params, dim, ngf):
    """One-time packing: zero-pad every feature dim to 128 lanes, fold the skip
    connection into embed/readout weights, and pack everything into a single
    bf16 weight slab + a single f32 bias slab."""
    P = _P
    assert ngf + dim <= P, "ngf + dim must fit in one 128-lane tile"
    KN = 15 * dim                 # noise features
    KI = 16 * dim                 # embed K ([noise | x0])
    f32 = jnp.float32

    # Embed block (KI, 2P): cols [0:ngf]=embed1, [ngf:ngf+dim]=skip, [P:P+ngf]=embed2.
    w_e = jnp.zeros((KI, 2 * P), f32)
    w_e = w_e.at[:, 0:ngf].set(params["w_e1"])
    w_e = w_e.at[:, P:P + ngf].set(params["w_e2"])
    cols = ngf + jnp.arange(dim)
    w_e = w_e.at[jnp.arange(dim) * 15, cols].set(1.0)    # noise[:, 0::15] selection
    w_e = w_e.at[KN + jnp.arange(dim), cols].set(1.0)    # + x0 identity

    def pad_res(w):  # (ngf, ngf) -> (P, P), zero-padded (pass-through on pad lanes)
        return jnp.zeros((P, P), f32).at[:ngf, :ngf].set(w)

    # Readout block (P, P): rows [0:ngf]=w_ro, rows [ngf:ngf+dim]=identity (skip add).
    w_ro = jnp.zeros((P, P), f32)
    w_ro = w_ro.at[:ngf, :dim].set(params["w_ro"])
    w_ro = w_ro.at[ngf + jnp.arange(dim), jnp.arange(dim)].set(1.0)

    w_slab = jnp.zeros((KI + 3 * P, 2 * P), f32)
    w_slab = w_slab.at[0:KI, :].set(w_e)
    w_slab = w_slab.at[KI:KI + P, 0:P].set(pad_res(params["w_r1a"]))
    w_slab = w_slab.at[KI:KI + P, P:2 * P].set(pad_res(params["w_r1b"]))
    w_slab = w_slab.at[KI + P:KI + 2 * P, 0:P].set(pad_res(params["w_r2a"]))
    w_slab = w_slab.at[KI + P:KI + 2 * P, P:2 * P].set(pad_res(params["w_r2b"]))
    w_slab = w_slab.at[KI + 2 * P:KI + 3 * P, 0:P].set(w_ro)

    b_slab = jnp.zeros((1, 7 * P), f32)
    b_slab = b_slab.at[:, 0:ngf].set(params["b_e1"])
    b_slab = b_slab.at[:, P:P + ngf].set(params["b_e2"])
    b_slab = b_slab.at[:, 2 * P:2 * P + ngf].set(params["b_r1a"])
    b_slab = b_slab.at[:, 3 * P:3 * P + ngf].set(params["b_r1b"])
    b_slab = b_slab.at[:, 4 * P:4 * P + ngf].set(params["b_r2a"])
    b_slab = b_slab.at[:, 5 * P:5 * P + ngf].set(params["b_r2b"])
    b_slab = b_slab.at[:, 6 * P:6 * P + dim].set(params["b_ro"])

    return {"w_slab": w_slab.astype(jnp.bfloat16), "b_slab": b_slab}


def _ref_forward(noise, x0, p):
    """Pure-JAX reference of the same forward (bf16-operand matmuls, f32
    elementwise, bf16-precision skip — mirrors the kernel's math)."""
    bf, f32 = jnp.bfloat16, jnp.float32

    def lin(x, w, b):
        return jnp.dot(x.astype(bf), w.astype(bf), preferred_element_type=f32) + b

    def res(x, w, b):
        return x + jax.nn.relu(lin(x, w, b))

    inp = jnp.concatenate([noise, x0], axis=-1)
    h1 = lin(inp, p["w_e1"], p["b_e1"])
    h1 = res(h1, p["w_r1a"], p["b_r1a"])
    h1 = res(h1, p["w_r1b"], p["b_r1b"])
    h2 = lin(inp, p["w_e2"], p["b_e2"])
    h = h2 + h1
    h = res(h, p["w_r2a"], p["b_r2a"])
    h = res(h, p["w_r2b"], p["b_r2b"])
    # skip rides through the network in bf16-rounded form (folded into matmuls)
    skip = noise[:, 0::15].astype(bf).astype(f32) + x0.astype(bf).astype(f32)
    skip = skip.astype(bf).astype(f32)
    return skip + lin(h, p["w_ro"], p["b_ro"])


def init_params(key, dim, ngf):
    """Deterministic synthetic weights, PyTorch-style layout transposed:
    weights (in, out), biases (1, out), all f32."""
    ks = jax.random.split(key, 14)

    def linear_params(kw, kb, fan_in, fan_out):
        scale = 1.0 / jnp.sqrt(jnp.float32(fan_in))
        w = jax.random.uniform(kw, (fan_in, fan_out), jnp.float32, -scale, scale)
        b = jax.random.uniform(kb, (1, fan_out), jnp.float32, -scale, scale)
        return w, b

    p = {}
    p["w_e1"], p["b_e1"] = linear_params(ks[0], ks[1], 16 * dim, ngf)
    p["w_e2"], p["b_e2"] = linear_params(ks[2], ks[3], 16 * dim, ngf)
    p["w_r1a"], p["b_r1a"] = linear_params(ks[4], ks[5], ngf, ngf)
    p["w_r1b"], p["b_r1b"] = linear_params(ks[6], ks[7], ngf, ngf)
    p["w_r2a"], p["b_r2a"] = linear_params(ks[8], ks[9], ngf, ngf)
    p["w_r2b"], p["b_r2b"] = linear_params(ks[10], ks[11], ngf, ngf)
    p["w_ro"], p["b_ro"] = linear_params(ks[12], ks[13], ngf, dim)
    return p


if __name__ == "__main__":
    B, dim, ngf = 64, 4, 32

    key = jax.random.PRNGKey(0)
    k_noise, k_x0, k_params = jax.random.split(key, 3)
    noise = jax.random.normal(k_noise, (B, 15 * dim), jnp.float32)
    x0 = jax.random.normal(k_x0, (B, dim), jnp.float32)
    params = init_params(k_params, dim, ngf)
    kparams = prepare_params(params, dim, ngf)

    ref = _ref_forward(noise, x0, params)

    # Default tiling (single grid step for this small batch).
    out = jax.block_until_ready(generator_forward(noise, x0, kparams))
    assert out.shape == (B, dim)
    err = float(jnp.max(jnp.abs(out - ref)))
    assert jnp.allclose(out, ref, atol=1e-3, rtol=1e-3), \
        f"mismatch vs JAX reference (max abs err {err})"

    # Multi-step grid (tile_b=16 -> grid=(4,)) to exercise the batch pipeline.
    out2 = jax.block_until_ready(generator_forward(noise, x0, kparams, tile_b=16))
    err2 = float(jnp.max(jnp.abs(out2 - ref)))
    assert jnp.allclose(out2, ref, atol=1e-3, rtol=1e-3), \
        f"tiled mismatch vs JAX reference (max abs err {err2})"

    print("KERNEL_OK")
</pallas_src>

<mosaic_0001>
module attributes {stable_mosaic.version = 11 : i64} {
  func.func @_generator_kernel(%arg0: i32, %arg1: memref<64x64xbf16, #tpu.memory_space<vmem>>, %arg2: memref<448x256xbf16, #tpu.memory_space<vmem>>, %arg3: memref<1x896xf32, #tpu.memory_space<vmem>>, %arg4: memref<64x128xf32, #tpu.memory_space<vmem>>) attributes {dimension_semantics = [#tpu.dimension_semantics<parallel>], iteration_bounds = array<i64: 1>, scalar_prefetch = 0 : i64, scratch_operands = 0 : i64, tpu.core_type = #tpu.core_type<tc>, window_params = [{transform_indices = @transform_0, window_bounds = array<i64: 64, 64>}, {pipeline_mode = #tpu.pipeline_mode<synchronous>, transform_indices = @transform_1, window_bounds = array<i64: 448, 256>}, {pipeline_mode = #tpu.pipeline_mode<synchronous>, transform_indices = @transform_2, window_bounds = array<i64: 1, 896>}, {transform_indices = @transform_3, window_bounds = array<i64: 64, 128>}]} {
    %c0 = arith.constant 0 : index
    %c0_0 = arith.constant 0 : index
    %0 = vector.load %arg1[%c0, %c0_0] : memref<64x64xbf16, #tpu.memory_space<vmem>>, vector<64x64xbf16>
    %c0_1 = arith.constant 0 : index
    %c0_2 = arith.constant 0 : index
    %1 = vector.load %arg2[%c0_1, %c0_2] : memref<448x256xbf16, #tpu.memory_space<vmem>>, vector<64x256xbf16>
    %cst = arith.constant dense<0.000000e+00> : vector<64x256xf32>
    %2 = tpu.matmul %0, %1, %cst {dimension_numbers = #tpu.dot_dimension_numbers<[1], [0], [0], [1], [0, 0, 1, 1], [], []>} : vector<64x64xbf16>, vector<64x256xbf16>, vector<64x256xf32> -> vector<64x256xf32>
    %c0_3 = arith.constant 0 : index
    %c0_4 = arith.constant 0 : index
    %3 = vector.load %arg3[%c0_3, %c0_4] : memref<1x896xf32, #tpu.memory_space<vmem>>, vector<1x256xf32>
    %4 = vector.broadcast %3 : vector<1x256xf32> to vector<64x256xf32>
    %5 = arith.addf %2, %4 : vector<64x256xf32>
    %6 = vector.extract_strided_slice %5 {offsets = [0, 0], sizes = [64, 128], strides = [1, 1]} : vector<64x256xf32> to vector<64x128xf32>
    %7 = vector.extract_strided_slice %5 {offsets = [0, 128], sizes = [64, 128], strides = [1, 1]} : vector<64x256xf32> to vector<64x128xf32>
    %c64 = arith.constant 64 : index
    %c0_5 = arith.constant 0 : index
    %8 = vector.load %arg2[%c64, %c0_5] : memref<448x256xbf16, #tpu.memory_space<vmem>>, vector<128x128xbf16>
    %c0_6 = arith.constant 0 : index
    %c256 = arith.constant 256 : index
    %9 = vector.load %arg3[%c0_6, %c256] : memref<1x896xf32, #tpu.memory_space<vmem>>, vector<1x128xf32>
    %10 = arith.truncf %6 : vector<64x128xf32> to vector<64x128xbf16>
    %cst_7 = arith.constant dense<0.000000e+00> : vector<64x128xf32>
    %11 = tpu.matmul %10, %8, %cst_7 {dimension_numbers = #tpu.dot_dimension_numbers<[1], [0], [0], [1], [0, 0, 1, 1], [], []>} : vector<64x128xbf16>, vector<128x128xbf16>, vector<64x128xf32> -> vector<64x128xf32>
    %12 = vector.broadcast %9 : vector<1x128xf32> to vector<64x128xf32>
    %13 = arith.addf %11, %12 : vector<64x128xf32>
    %cst_8 = arith.constant 0.000000e+00 : f32
    %14 = vector.broadcast %cst_8 : f32 to vector<64x128xf32>
    %15 = arith.maximumf %13, %14 : vector<64x128xf32>
    %16 = arith.addf %6, %15 : vector<64x128xf32>
    %c64_9 = arith.constant 64 : index
    %c128 = arith.constant 128 : index
    %17 = vector.load %arg2[%c64_9, %c128] : memref<448x256xbf16, #tpu.memory_space<vmem>>, vector<128x128xbf16>
    %c0_10 = arith.constant 0 : index
    %c384 = arith.constant 384 : index
    %18 = vector.load %arg3[%c0_10, %c384] : memref<1x896xf32, #tpu.memory_space<vmem>>, vector<1x128xf32>
    %19 = arith.truncf %16 : vector<64x128xf32> to vector<64x128xbf16>
    %cst_11 = arith.constant dense<0.000000e+00> : vector<64x128xf32>
    %20 = tpu.matmul %19, %17, %cst_11 {dimension_numbers = #tpu.dot_dimension_numbers<[1], [0], [0], [1], [0, 0, 1, 1], [], []>} : vector<64x128xbf16>, vector<128x128xbf16>, vector<64x128xf32> -> vector<64x128xf32>
    %21 = vector.broadcast %18 : vector<1x128xf32> to vector<64x128xf32>
    %22 = arith.addf %20, %21 : vector<64x128xf32>
    %cst_12 = arith.constant 0.000000e+00 : f32
    %23 = vector.broadcast %cst_12 : f32 to vector<64x128xf32>
    %24 = arith.maximumf %22, %23 : vector<64x128xf32>
    %25 = arith.addf %16, %24 : vector<64x128xf32>
    %26 = arith.addf %7, %25 : vector<64x128xf32>
    %c192 = arith.constant 192 : index
    %c0_13 = arith.constant 0 : index
    %27 = vector.load %arg2[%c192, %c0_13] : memref<448x256xbf16, #tpu.memory_space<vmem>>, vector<128x128xbf16>
    %c0_14 = arith.constant 0 : index
    %c512 = arith.constant 512 : index
    %28 = vector.load %arg3[%c0_14, %c512] : memref<1x896xf32, #tpu.memory_space<vmem>>, vector<1x128xf32>
    %29 = arith.truncf %26 : vector<64x128xf32> to vector<64x128xbf16>
    %cst_15 = arith.constant dense<0.000000e+00> : vector<64x128xf32>
    %30 = tpu.matmul %29, %27, %cst_15 {dimension_numbers = #tpu.dot_dimension_numbers<[1], [0], [0], [1], [0, 0, 1, 1], [], []>} : vector<64x128xbf16>, vector<128x128xbf16>, vector<64x128xf32> -> vector<64x128xf32>
    %31 = vector.broadcast %28 : vector<1x128xf32> to vector<64x128xf32>
    %32 = arith.addf %30, %31 : vector<64x128xf32>
    %cst_16 = arith.constant 0.000000e+00 : f32
    %33 = vector.broadcast %cst_16 : f32 to vector<64x128xf32>
    %34 = arith.maximumf %32, %33 : vector<64x128xf32>
    %35 = arith.addf %26, %34 : vector<64x128xf32>
    %c192_17 = arith.constant 192 : index
    %c128_18 = arith.constant 128 : index
    %36 = vector.load %arg2[%c192_17, %c128_18] : memref<448x256xbf16, #tpu.memory_space<vmem>>, vector<128x128xbf16>
    %c0_19 = arith.constant 0 : index
    %c640 = arith.constant 640 : index
    %37 = vector.load %arg3[%c0_19, %c640] : memref<1x896xf32, #tpu.memory_space<vmem>>, vector<1x128xf32>
    %38 = arith.truncf %35 : vector<64x128xf32> to vector<64x128xbf16>
    %cst_20 = arith.constant dense<0.000000e+00> : vector<64x128xf32>
    %39 = tpu.matmul %38, %36, %cst_20 {dimension_numbers = #tpu.dot_dimension_numbers<[1], [0], [0], [1], [0, 0, 1, 1], [], []>} : vector<64x128xbf16>, vector<128x128xbf16>, vector<64x128xf32> -> vector<64x128xf32>
    %40 = vector.broadcast %37 : vector<1x128xf32> to vector<64x128xf32>
    %41 = arith.addf %39, %40 : vector<64x128xf32>
    %cst_21 = arith.constant 0.000000e+00 : f32
    %42 = vector.broadcast %cst_21 : f32 to vector<64x128xf32>
    %43 = arith.maximumf %41, %42 : vector<64x128xf32>
    %44 = arith.addf %35, %43 : vector<64x128xf32>
    %45 = arith.truncf %44 : vector<64x128xf32> to vector<64x128xbf16>
    %c320 = arith.constant 320 : index
    %c0_22 = arith.constant 0 : index
    %46 = vector.load %arg2[%c320, %c0_22] : memref<448x256xbf16, #tpu.memory_space<vmem>>, vector<128x128xbf16>
    %cst_23 = arith.constant dense<0.000000e+00> : vector<64x128xf32>
    %47 = tpu.matmul %45, %46, %cst_23 {dimension_numbers = #tpu.dot_dimension_numbers<[1], [0], [0], [1], [0, 0, 1, 1], [], []>} : vector<64x128xbf16>, vector<128x128xbf16>, vector<64x128xf32> -> vector<64x128xf32>
    %c0_24 = arith.constant 0 : index
    %c768 = arith.constant 768 : index
    %48 = vector.load %arg3[%c0_24, %c768] : memref<1x896xf32, #tpu.memory_space<vmem>>, vector<1x128xf32>
    %49 = vector.broadcast %48 : vector<1x128xf32> to vector<64x128xf32>
    %50 = arith.addf %47, %49 : vector<64x128xf32>
    %c0_25 = arith.constant 0 : index
    %c0_26 = arith.constant 0 : index
    %51 = vector.load %arg4[%c0_25, %c0_26] : memref<64x128xf32, #tpu.memory_space<vmem>>, vector<64x128xf32>
    tpu.vector_store %arg4[%c0_25, %c0_26], %50 {strides = array<i32>} : memref<64x128xf32, #tpu.memory_space<vmem>>, vector<64x128xf32>,
    return
  }
  func.func @transform_0(%arg0: i32) -> (i32, i32) {
    %c0_i32 = arith.constant 0 : i32
    %c0_i32_0 = arith.constant 0 : i32
    return %arg0, %c0_i32 : i32, i32
  }
  func.func @transform_1(%arg0: i32) -> (i32, i32) {
    %c0_i32 = arith.constant 0 : i32
    %c0_i32_0 = arith.constant 0 : i32
    %c0_i32_1 = arith.constant 0 : i32
    return %c0_i32, %c0_i32_0 : i32, i32
  }
  func.func @transform_2(%arg0: i32) -> (i32, i32) {
    %c0_i32 = arith.constant 0 : i32
    %c0_i32_0 = arith.constant 0 : i32
    %c0_i32_1 = arith.constant 0 : i32
    return %c0_i32, %c0_i32_0 : i32, i32
  }
  func.func @transform_3(%arg0: i32) -> (i32, i32) {
    %c0_i32 = arith.constant 0 : i32
    %c0_i32_0 = arith.constant 0 : i32
    return %arg0, %c0_i32 : i32, i32
  }
}

</mosaic_0001>

<llo_original>
// kernel: tpu_custom_call.1
$region0: #{tpu_custom_call.1}
  #allocation0 [shape = 'u32[]', space=smem, size = 0x4, offset = 0x4, fixed_abs, tag = 'smem constant byte address 0x4 - core index']
  #allocation1 [shape = 'u32[144,128]{1,0:T(1,128)}', space=vmem, size = 0x12000, scoped, tag = 'internal scratch']
  %s0 = inlined_call_operand.hbm [shape: bf16[64,64], index: 0, kind: input, shape index: {}]
  %s1 = inlined_call_operand.hbm [shape: bf16[448,256], index: 1, kind: input, shape index: {}]
  %s2 = inlined_call_operand.hbm [shape: f32[1,896], index: 2, kind: input, shape index: {}]
  %s3 = inlined_call_operand.hbm [shape: f32[64,128], index: 3, kind: output, shape index: {}]
  %s4 = sld [smem:[#allocation0]]
  $region34: #{tpu_custom_call.1} parent=0
    _
  %s6 = ssub.s32 1, %s4
  %s7 = scalar_select 0, %s6, %s4
  $region1: #{tpu_custom_call.1} parent=0
    #allocation2 [shape = 'u8[16384]{0}', space=vmem, size = 0x4000, scoped, tag = 'input window, operand 0, single buffered']
    #allocation3 [shape = 's32[1]{0}', space=sflag, size = 0x4, scoped, tag = 'scoped memory for tpu_custom_call.1']
    #allocation4 [shape = 's32[1]{0}', space=sflag, size = 0x4, scoped, tag = 'scoped memory for tpu_custom_call.1']
    #allocation5 [shape = 'u8[229376]{0}', space=vmem, size = 0x38000, scoped, tag = 'input window, operand 1, single buffered']
    #allocation6 [shape = 's32[1]{0}', space=sflag, size = 0x4, scoped, tag = 'scoped memory for tpu_custom_call.1']
    #allocation7 [shape = 'u8[3584]{0}', space=vmem, size = 0x1000, scoped, tag = 'input window, operand 2, single buffered']
    #allocation8 [shape = 'u8[32768]{0}', space=vmem, size = 0x8000, scoped, tag = 'output window, operand 0, single buffered']
    %8 = vsyncpa [#allocation3], 0
    %9 = vsyncpa [#allocation6], 0
    %10 = vsyncpa [#allocation4], 0
    // Predicated region
    $region2: #{tpu_custom_call.1} parent=1 // pred_check
      _
    $region3: #{tpu_custom_call.1} parent=1 // pred_check_branch
      %12 = sbr.rel (0) target = $region5
    $region4: #{tpu_custom_call.1} parent=1 // pred_region
      %s14 = ssub.s32 512, 512
      %15 = vsyncadd [#allocation3], %s14
      %s16 = sshll.u32 [#allocation2], 4
      %s17 = int_to_ptr.vmem [resolvable:$true] %s16
      %22 = dma.hbm_to_vmem [thread:$0]  %s0, 512, %s17, [#allocation3], 64, 64, 4
    $region5: #{tpu_custom_call.1} parent=1 // pred_fallthru
      _
    // Predicated region
    $region6: #{tpu_custom_call.1} parent=1 // pred_check
      _
    $region7: #{tpu_custom_call.1} parent=1 // pred_check_branch
      %24 = sbr.rel (0) target = $region9
    $region8: #{tpu_custom_call.1} parent=1 // pred_region
      %s26 = ssub.s32 7168, 7168
      %27 = vsyncadd [#allocation6], %s26
      %s28 = sshll.u32 [#allocation5], 4
      %s29 = int_to_ptr.vmem [resolvable:$true] %s28
      %34 = dma.hbm_to_vmem [thread:$0]  %s1, 7168, %s29, [#allocation6], 128, 128, 8
    $region9: #{tpu_custom_call.1} parent=1 // pred_fallthru
      _
    // Predicated region
    $region10: #{tpu_custom_call.1} parent=1 // pred_check
      _
    $region11: #{tpu_custom_call.1} parent=1 // pred_check_branch
      %36 = sbr.rel (0) target = $region13
    $region12: #{tpu_custom_call.1} parent=1 // pred_region
      %s38 = ssub.s32 112, 112
      %39 = vsyncadd [#allocation6], %s38
      %s41 = sshll.u32 [#allocation7], 4
      %s42 = int_to_ptr.vmem [resolvable:$true] %s41
      %44 = dma.hbm_to_vmem [thread:$0]  %s2, 112, %s42, [#allocation6]
    $region13: #{tpu_custom_call.1} parent=1 // pred_fallthru
      _
    // Predicated region
    $region14: #{tpu_custom_call.1} parent=1 // pred_check
      _
    $region15: #{tpu_custom_call.1} parent=1 // pred_check_branch
      %46 = sbr.rel (0) target = $region17
    $region16: #{tpu_custom_call.1} parent=1 // pred_region
      %47 = dma.done [#allocation3], 512
    $region17: #{tpu_custom_call.1} parent=1 // pred_fallthru
      _
    // Predicated region
    $region18: #{tpu_custom_call.1} parent=1 // pred_check
      _
    $region19: #{tpu_custom_call.1} parent=1 // pred_check_branch
      %49 = sbr.rel (0) target = $region21
    $region20: #{tpu_custom_call.1} parent=1 // pred_region
      %50 = dma.done [#allocation6], 7168
    $region21: #{tpu_custom_call.1} parent=1 // pred_fallthru
      _
    // Predicated region
    $region22: #{tpu_custom_call.1} parent=1 // pred_check
      _
    $region23: #{tpu_custom_call.1} parent=1 // pred_check_branch
      %52 = sbr.rel (0) target = $region25
    $region24: #{tpu_custom_call.1} parent=1 // pred_region
      %53 = dma.done [#allocation6], 112
    $region25: #{tpu_custom_call.1} parent=1 // pred_fallthru
      _
    %v55 = vld [vmem:[#allocation2] sm:$0xf]
    %v56 = vld [vmem:[#allocation2 + $0x4] sm:$0xf]
    %v57 = vld [vmem:[#allocation2 + $0x8] sm:$0xf]
    %v58 = vld [vmem:[#allocation2 + $0xc] sm:$0xf]
    %v59 = vld [vmem:[#allocation2 + $0x10] sm:$0xf]
    %v60 = vld [vmem:[#allocation2 + $0x14] sm:$0xf]
    %v61 = vld [vmem:[#allocation2 + $0x18] sm:$0xf]
    %v62 = vld [vmem:[#allocation2 + $0x1c] sm:$0xf]
    %v63 = vld [vmem:[#allocation5] sm:$0xff]
    %v64 = vld [vmem:[#allocation5 + $0x8] sm:$0xff]
    %v65 = vld [vmem:[#allocation5 + $0x10] sm:$0xff]
    %v66 = vld [vmem:[#allocation5 + $0x18] sm:$0xff]
    %v67 = vld [vmem:[#allocation5 + $0x20] sm:$0xff]
    %v68 = vld [vmem:[#allocation5 + $0x28] sm:$0xff]
    %v69 = vld [vmem:[#allocation5 + $0x30] sm:$0xff]
    %v70 = vld [vmem:[#allocation5 + $0x38] sm:$0xff]
    %v71 = vld [vmem:[#allocation7] sm:$0x3]
    %v73 = vlaneseq
    %v74 = vshrl.u32 %v73, 7
    %v75 = vsub.s32 0, %v74
    %v76 = vrot.slane %v71, %v75
    %v77 = vlaneseq
    %v78 = vshrl.u32 %v77, 7
    %v79 = vsub.s32 1, %v78
    %v80 = vrot.slane %v71, %v79
    %v91 = vunpack.c.l.b16 %v55
    %v92 = vunpack.c.l.b16 %v56
    %v93 = vunpack.c.l.b16 %v57
    %v94 = vunpack.c.l.b16 %v58
    %v95 = vunpack.c.l.b16 %v59
    %v96 = vunpack.c.l.b16 %v60
    %v97 = vunpack.c.l.b16 %v61
    %v98 = vunpack.c.l.b16 %v62
    %v99 = vpack.c.b16 %v92, %v91
    %v100 = vpack.c.b16 %v94, %v93
    %v101 = vpack.c.b16 %v96, %v95
    %v102 = vpack.c.b16 %v98, %v97
    %v111 = vunpack.c.l.b16 %v63
    %v112 = vunpack.c.h.b16 %v63
    %v113 = vunpack.c.l.b16 %v64
    %v114 = vunpack.c.h.b16 %v64
    %v115 = vunpack.c.l.b16 %v65
    %v116 = vunpack.c.h.b16 %v65
    %v117 = vunpack.c.l.b16 %v66
    %v118 = vunpack.c.h.b16 %v66
    %v119 = vunpack.c.l.b16 %v67
    %v120 = vunpack.c.h.b16 %v67
    %v121 = vunpack.c.l.b16 %v68
    %v122 = vunpack.c.h.b16 %v68
    %v123 = vunpack.c.l.b16 %v69
    %v124 = vunpack.c.h.b16 %v69
    %v125 = vunpack.c.l.b16 %v70
    %v126 = vunpack.c.h.b16 %v70
    %v127 = vpack.c.b16 %v113, %v111
    %v128 = vpack.c.b16 %v114, %v112
    %v129 = vpack.c.b16 %v117, %v115
    %v130 = vpack.c.b16 %v118, %v116
    %v131 = vpack.c.b16 %v121, %v119
    %v132 = vpack.c.b16 %v122, %v120
    %v133 = vpack.c.b16 %v125, %v123
    %v134 = vpack.c.b16 %v126, %v124
    %vm143 = vcmask 523264
    %v145 = vsel %vm143, %v99, 0
    %v148 = vsel %vm143, %v100, 0
    %v151 = vsel %vm143, %v101, 0
    %v154 = vsel %vm143, %v102, 0
    %156 = vmatprep.subr.bf16.mxu0 0
    %157 = vmatpush1.bf16.msra.mxu0 0
    %158 = vmatprep.subr.bf16.mxu0 0
    %159 = vmatpush1.bf16.msra.mxu0 0
    %160 = vmatprep.subr.bf16.mxu0 0
    %161 = vmatpush1.bf16.msra.mxu0 0
    %162 = vmatprep.subr.bf16.mxu0 0
    %163 = vmatpush1.bf16.msra.mxu0 0
    %164 = vmatprep.subr.bf16.mxu0 %v134
    %165 = vmatpush1.bf16.msra.mxu0 %v133
    %166 = vmatprep.subr.bf16.mxu0 %v132
    %167 = vmatpush1.bf16.msra.mxu0 %v131
    %168 = vmatprep.subr.bf16.mxu0 %v130
    %169 = vmatpush1.bf16.msra.mxu0 %v129
    %170 = vmatprep.subr.bf16.mxu0 %v128
    %171 = vmatpush1.bf16.msra.mxu0 %v127
    %172 = vmatprep.subr.bf16.mxu0 0
    %173 = vmatpush2.bf16.msra.mxu0 0
    %174 = vmatprep.subr.bf16.mxu0 0
    %175 = vmatpush2.bf16.msra.mxu0 0
    %176 = vmatprep.subr.bf16.mxu0 0
    %177 = vmatpush2.bf16.msra.mxu0 0
    %178 = vmatprep.subr.bf16.mxu0 0
    %179 = vmatpush2.bf16.msra.mxu0 0
    %180 = vmatprep.subr.bf16.mxu0 0
    %181 = vmatpush2.bf16.msra.mxu0 0
    %182 = vmatprep.subr.bf16.mxu0 0
    %183 = vmatpush2.bf16.msra.mxu0 0
    %184 = vmatprep.subr.bf16.mxu0 0
    %185 = vmatpush2.bf16.msra.mxu0 0
    %186 = vmatprep.subr.bf16.mxu0 0
    %187 = vmatpush2.bf16.msra.mxu0 0
    %188 = vmatprep.mubr.bf16.mxu0 0
    %189 = vmatmul.mubr.bf16.gmra.mxu0 %v145
    %v190 = vpop.f32.mrf.mxu0
    %v191 = vadd.f32 %v76, %v190
    %v192 = vpop.f32.mrf.mxu0
    %v193 = vadd.f32 %v80, %v192
    %v194 = vpop.f32.mrf.mxu0
    %v195 = vadd.f32 %v76, %v194
    %v196 = vpop.f32.mrf.mxu0
    %v197 = vadd.f32 %v80, %v196
    %198 = vmatprep.mubr.bf16.mxu0 0
    %199 = vmatmul.mubr.bf16.gmra.mxu0 %v148
    %v200 = vpop.f32.mrf.mxu0
    %v201 = vadd.f32 %v76, %v200
    %v202 = vpop.f32.mrf.mxu0
    %v203 = vadd.f32 %v80, %v202
    %v204 = vpop.f32.mrf.mxu0
    %v205 = vadd.f32 %v76, %v204
    %v206 = vpop.f32.mrf.mxu0
    %v207 = vadd.f32 %v80, %v206
    %208 = vmatprep.mubr.bf16.mxu0 0
    %209 = vmatmul.mubr.bf16.gmra.mxu0 %v151
    %v210 = vpop.f32.mrf.mxu0
    %v211 = vadd.f32 %v76, %v210
    %v212 = vpop.f32.mrf.mxu0
    %v213 = vadd.f32 %v80, %v212
    %v214 = vpop.f32.mrf.mxu0
    %v215 = vadd.f32 %v76, %v214
    %v216 = vpop.f32.mrf.mxu0
    %v217 = vadd.f32 %v80, %v216
    %218 = vmatprep.mubr.bf16.mxu0 0
    %219 = vmatmul.mubr.bf16.gmra.mxu0 %v154
    %v220 = vpop.f32.mrf.mxu0
    %v221 = vadd.f32 %v76, %v220
    %v222 = vpop.f32.mrf.mxu0
    %v223 = vadd.f32 %v80, %v222
    %v224 = vpop.f32.mrf.mxu0
    %v225 = vadd.f32 %v76, %v224
    %v226 = vpop.f32.mrf.mxu0
    %v227 = vadd.f32 %v80, %v226
    %228 = vdwg.mxu0
    %v229 = vld [vmem:[#allocation5 + $0x40] sm:$0xf]
    %v230 = vld [vmem:[#allocation5 + $0x48] sm:$0xf]
    %v231 = vld [vmem:[#allocation5 + $0x50] sm:$0xf]
    %v232 = vld [vmem:[#allocation5 + $0x58] sm:$0xf]
    %v233 = vld [vmem:[#allocation5 + $0x60] sm:$0xf]
    %v234 = vld [vmem:[#allocation5 + $0x68] sm:$0xf]
    %v235 = vld [vmem:[#allocation5 + $0x70] sm:$0xf]
    %v236 = vld [vmem:[#allocation5 + $0x78] sm:$0xf]
    %v237 = vld [vmem:[#allocation5 + $0x80] sm:$0xf]
    %v238 = vld [vmem:[#allocation5 + $0x88] sm:$0xf]
    %v239 = vld [vmem:[#allocation5 + $0x90] sm:$0xf]
    %v240 = vld [vmem:[#allocation5 + $0x98] sm:$0xf]
    %v241 = vld [vmem:[#allocation5 + $0xa0] sm:$0xf]
    %v242 = vld [vmem:[#allocation5 + $0xa8] sm:$0xf]
    %v243 = vld [vmem:[#allocation5 + $0xb0] sm:$0xf]
    %v244 = vld [vmem:[#allocation5 + $0xb8] sm:$0xf]
    %v245 = vld [vmem:[#allocation7 + $0x2] sm:$0x1]
    %v246 = vpack.c.bf16 %v195, %v191
    %v247 = vpack.c.bf16 %v205, %v201
    %v248 = vpack.c.bf16 %v215, %v211
    %v249 = vpack.c.bf16 %v225, %v221
    %v251 = vlaneseq
    %v252 = vshrl.u32 %v251, 7
    %v253 = vsub.s32 0, %v252
    %v254 = vrot.slane %v245, %v253
    %v272 = vunpack.c.l.b16 %v229
    %v273 = vunpack.c.l.b16 %v230
    %v274 = vunpack.c.l.b16 %v231
    %v275 = vunpack.c.l.b16 %v232
    %v276 = vunpack.c.l.b16 %v233
    %v277 = vunpack.c.l.b16 %v234
    %v278 = vunpack.c.l.b16 %v235
    %v279 = vunpack.c.l.b16 %v236
    %v280 = vunpack.c.l.b16 %v237
    %v281 = vunpack.c.l.b16 %v238
    %v282 = vunpack.c.l.b16 %v239
    %v283 = vunpack.c.l.b16 %v240
    %v284 = vunpack.c.l.b16 %v241
    %v285 = vunpack.c.l.b16 %v242
    %v286 = vunpack.c.l.b16 %v243
    %v287 = vunpack.c.l.b16 %v244
    %v288 = vpack.c.b16 %v273, %v272
    %v289 = vpack.c.b16 %v275, %v274
    %v290 = vpack.c.b16 %v277, %v276
    %v291 = vpack.c.b16 %v279, %v278
    %v292 = vpack.c.b16 %v281, %v280
    %v293 = vpack.c.b16 %v283, %v282
    %v294 = vpack.c.b16 %v285, %v284
    %v295 = vpack.c.b16 %v287, %v286
    %304 = vmatprep.subr.bf16.mxu0 0
    %305 = vmatpush1.bf16.msra.mxu0 %v295
    %306 = vmatprep.subr.bf16.mxu0 0
    %307 = vmatpush1.bf16.msra.mxu0 %v294
    %308 = vmatprep.subr.bf16.mxu0 0
    %309 = vmatpush1.bf16.msra.mxu0 %v293
    %310 = vmatprep.subr.bf16.mxu0 0
    %311 = vmatpush1.bf16.msra.mxu0 %v292
    %312 = vmatprep.subr.bf16.mxu0 0
    %313 = vmatpush1.bf16.msra.mxu0 %v291
    %314 = vmatprep.subr.bf16.mxu0 0
    %315 = vmatpush1.bf16.msra.mxu0 %v290
    %316 = vmatprep.subr.bf16.mxu0 0
    %317 = vmatpush1.bf16.msra.mxu0 %v289
    %318 = vmatprep.subr.bf16.mxu0 0
    %319 = vmatpush1.bf16.msra.mxu0 %v288
    %320 = vmatprep.subr.bf16.mxu0 0
    %321 = vmatpush2.bf16.msra.mxu0 0
    %322 = vmatprep.subr.bf16.mxu0 0
    %323 = vmatpush2.bf16.msra.mxu0 0
    %324 = vmatprep.subr.bf16.mxu0 0
    %325 = vmatpush2.bf16.msra.mxu0 0
    %326 = vmatprep.subr.bf16.mxu0 0
    %327 = vmatpush2.bf16.msra.mxu0 0
    %328 = vmatprep.subr.bf16.mxu0 0
    %329 = vmatpush2.bf16.msra.mxu0 0
    %330 = vmatprep.subr.bf16.mxu0 0
    %331 = vmatpush2.bf16.msra.mxu0 0
    %332 = vmatprep.subr.bf16.mxu0 0
    %333 = vmatpush2.bf16.msra.mxu0 0
    %334 = vmatprep.subr.bf16.mxu0 0
    %335 = vmatpush2.bf16.msra.mxu0 0
    %336 = vmatprep.mubr.bf16.mxu0 0
    %337 = vmatmul.mubr.bf16.gmra.mxu0 %v246
    %v338 = vpop.f32.mrf.mxu0
    %v339 = vadd.f32 %v254, %v338
    %v340 = vpop.f32.mrf.mxu0
    %v341 = vpop.f32.mrf.mxu0
    %v342 = vadd.f32 %v254, %v341
    %v343 = vpop.f32.mrf.mxu0
    %344 = vmatprep.mubr.bf16.mxu0 0
    %345 = vmatmul.mubr.bf16.gmra.mxu0 %v247
    %v346 = vpop.f32.mrf.mxu0
    %v347 = vadd.f32 %v254, %v346
    %v348 = vpop.f32.mrf.mxu0
    %v349 = vpop.f32.mrf.mxu0
    %v350 = vadd.f32 %v254, %v349
    %v351 = vpop.f32.mrf.mxu0
    %352 = vmatprep.mubr.bf16.mxu0 0
    %353 = vmatmul.mubr.bf16.gmra.mxu0 %v248
    %v354 = vpop.f32.mrf.mxu0
    %v355 = vadd.f32 %v254, %v354
    %v356 = vpop.f32.mrf.mxu0
    %v357 = vpop.f32.mrf.mxu0
    %v358 = vadd.f32 %v254, %v357
    %v359 = vpop.f32.mrf.mxu0
    %360 = vmatprep.mubr.bf16.mxu0 0
    %361 = vmatmul.mubr.bf16.gmra.mxu0 %v249
    %v362 = vpop.f32.mrf.mxu0
    %v363 = vadd.f32 %v254, %v362
    %v364 = vpop.f32.mrf.mxu0
    %v365 = vpop.f32.mrf.mxu0
    %v366 = vadd.f32 %v254, %v365
    %v367 = vpop.f32.mrf.mxu0
    %368 = vdwg.mxu0
    %v369 = vmax.f32 %v339, 0.0
    %v370 = vmax.f32 %v342, 0.0
    %v371 = vmax.f32 %v347, 0.0
    %v372 = vmax.f32 %v350, 0.0
    %v373 = vmax.f32 %v355, 0.0
    %v374 = vmax.f32 %v358, 0.0
    %v375 = vmax.f32 %v363, 0.0
    %v376 = vmax.f32 %v366, 0.0
    %v377 = vadd.f32 %v191, %v369
    %v378 = vadd.f32 %v195, %v370
    %v379 = vadd.f32 %v201, %v371
    %v380 = vadd.f32 %v205, %v372
    %v381 = vadd.f32 %v211, %v373
    %v382 = vadd.f32 %v215, %v374
    %v383 = vadd.f32 %v221, %v375
    %v384 = vadd.f32 %v225, %v376
    %v385 = vld [vmem:[#allocation5 + $0x44] sm:$0xf]
    %v386 = vld [vmem:[#allocation5 + $0x4c] sm:$0xf]
    %v387 = vld [vmem:[#allocation5 + $0x54] sm:$0xf]
    %v388 = vld [vmem:[#allocation5 + $0x5c] sm:$0xf]
    %v389 = vld [vmem:[#allocation5 + $0x64] sm:$0xf]
    %v390 = vld [vmem:[#allocation5 + $0x6c] sm:$0xf]
    %v391 = vld [vmem:[#allocation5 + $0x74] sm:$0xf]
    %v392 = vld [vmem:[#allocation5 + $0x7c] sm:$0xf]
    %v393 = vld [vmem:[#allocation5 + $0x84] sm:$0xf]
    %v394 = vld [vmem:[#allocation5 + $0x8c] sm:$0xf]
    %v395 = vld [vmem:[#allocation5 + $0x94] sm:$0xf]
    %v396 = vld [vmem:[#allocation5 + $0x9c] sm:$0xf]
    %v397 = vld [vmem:[#allocation5 + $0xa4] sm:$0xf]
    %v398 = vld [vmem:[#allocation5 + $0xac] sm:$0xf]
    %v399 = vld [vmem:[#allocation5 + $0xb4] sm:$0xf]
    %v400 = vld [vmem:[#allocation5 + $0xbc] sm:$0xf]
    %v401 = vld [vmem:[#allocation7 + $0x3] sm:$0x1]
    %v402 = vpack.c.bf16 %v378, %v377
    %v403 = vpack.c.bf16 %v380, %v379
    %v404 = vpack.c.bf16 %v382, %v381
    %v405 = vpack.c.bf16 %v384, %v383
    %v407 = vlaneseq
    %v408 = vshrl.u32 %v407, 7
    %v409 = vsub.s32 0, %v408
    %v410 = vrot.slane %v401, %v409
    %v428 = vunpack.c.l.b16 %v385
    %v429 = vunpack.c.l.b16 %v386
    %v430 = vunpack.c.l.b16 %v387
    %v431 = vunpack.c.l.b16 %v388
    %v432 = vunpack.c.l.b16 %v389
    %v433 = vunpack.c.l.b16 %v390
    %v434 = vunpack.c.l.b16 %v391
    %v435 = vunpack.c.l.b16 %v392
    %v436 = vunpack.c.l.b16 %v393
    %v437 = vunpack.c.l.b16 %v394
    %v438 = vunpack.c.l.b16 %v395
    %v439 = vunpack.c.l.b16 %v396
    %v440 = vunpack.c.l.b16 %v397
    %v441 = vunpack.c.l.b16 %v398
    %v442 = vunpack.c.l.b16 %v399
    %v443 = vunpack.c.l.b16 %v400
    %v444 = vpack.c.b16 %v429, %v428
    %v445 = vpack.c.b16 %v431, %v430
    %v446 = vpack.c.b16 %v433, %v432
    %v447 = vpack.c.b16 %v435, %v434
    %v448 = vpack.c.b16 %v437, %v436
    %v449 = vpack.c.b16 %v439, %v438
    %v450 = vpack.c.b16 %v441, %v440
    %v451 = vpack.c.b16 %v443, %v442
    %460 = vmatprep.subr.bf16.mxu0 0
    %461 = vmatpush1.bf16.msra.mxu0 %v451
    %462 = vmatprep.subr.bf16.mxu0 0
    %463 = vmatpush1.bf16.msra.mxu0 %v450
    %464 = vmatprep.subr.bf16.mxu0 0
    %465 = vmatpush1.bf16.msra.mxu0 %v449
    %466 = vmatprep.subr.bf16.mxu0 0
    %467 = vmatpush1.bf16.msra.mxu0 %v448
    %468 = vmatprep.subr.bf16.mxu0 0
    %469 = vmatpush1.bf16.msra.mxu0 %v447
    %470 = vmatprep.subr.bf16.mxu0 0
    %471 = vmatpush1.bf16.msra.mxu0 %v446
    %472 = vmatprep.subr.bf16.mxu0 0
    %473 = vmatpush1.bf16.msra.mxu0 %v445
    %474 = vmatprep.subr.bf16.mxu0 0
    %475 = vmatpush1.bf16.msra.mxu0 %v444
    %476 = vmatprep.subr.bf16.mxu0 0
    %477 = vmatpush2.bf16.msra.mxu0 0
    %478 = vmatprep.subr.bf16.mxu0 0
    %479 = vmatpush2.bf16.msra.mxu0 0
    %480 = vmatprep.subr.bf16.mxu0 0
    %481 = vmatpush2.bf16.msra.mxu0 0
    %482 = vmatprep.subr.bf16.mxu0 0
    %483 = vmatpush2.bf16.msra.mxu0 0
    %484 = vmatprep.subr.bf16.mxu0 0
    %485 = vmatpush2.bf16.msra.mxu0 0
    %486 = vmatprep.subr.bf16.mxu0 0
    %487 = vmatpush2.bf16.msra.mxu0 0
    %488 = vmatprep.subr.bf16.mxu0 0
    %489 = vmatpush2.bf16.msra.mxu0 0
    %490 = vmatprep.subr.bf16.mxu0 0
    %491 = vmatpush2.bf16.msra.mxu0 0
    %492 = vmatprep.mubr.bf16.mxu0 0
    %493 = vmatmul.mubr.bf16.gmra.mxu0 %v402
    %v494 = vpop.f32.mrf.mxu0
    %v495 = vadd.f32 %v410, %v494
    %v496 = vpop.f32.mrf.mxu0
    %v497 = vpop.f32.mrf.mxu0
    %v498 = vadd.f32 %v410, %v497
    %v499 = vpop.f32.mrf.mxu0
    %500 = vmatprep.mubr.bf16.mxu0 0
    %501 = vmatmul.mubr.bf16.gmra.mxu0 %v403
    %v502 = vpop.f32.mrf.mxu0
    %v503 = vadd.f32 %v410, %v502
    %v504 = vpop.f32.mrf.mxu0
    %v505 = vpop.f32.mrf.mxu0
    %v506 = vadd.f32 %v410, %v505
    %v507 = vpop.f32.mrf.mxu0
    %508 = vmatprep.mubr.bf16.mxu0 0
    %509 = vmatmul.mubr.bf16.gmra.mxu0 %v404
    %v510 = vpop.f32.mrf.mxu0
    %v511 = vadd.f32 %v410, %v510
    %v512 = vpop.f32.mrf.mxu0
    %v513 = vpop.f32.mrf.mxu0
    %v514 = vadd.f32 %v410, %v513
    %v515 = vpop.f32.mrf.mxu0
    %516 = vmatprep.mubr.bf16.mxu0 0
    %517 = vmatmul.mubr.bf16.gmra.mxu0 %v405
    %v518 = vpop.f32.mrf.mxu0
    %v519 = vadd.f32 %v410, %v518
    %v520 = vpop.f32.mrf.mxu0
    %v521 = vpop.f32.mrf.mxu0
    %v522 = vadd.f32 %v410, %v521
    %v523 = vpop.f32.mrf.mxu0
    %524 = vdwg.mxu0
    %v525 = vmax.f32 %v495, 0.0
    %v526 = vmax.f32 %v498, 0.0
    %v527 = vmax.f32 %v503, 0.0
    %v528 = vmax.f32 %v506, 0.0
    %v529 = vmax.f32 %v511, 0.0
    %v530 = vmax.f32 %v514, 0.0
    %v531 = vmax.f32 %v519, 0.0
    %v532 = vmax.f32 %v522, 0.0
    %v533 = vadd.f32 %v377, %v525
    %v534 = vadd.f32 %v378, %v526
    %v535 = vadd.f32 %v379, %v527
    %v536 = vadd.f32 %v380, %v528
    %v537 = vadd.f32 %v381, %v529
    %v538 = vadd.f32 %v382, %v530
    %v539 = vadd.f32 %v383, %v531
    %v540 = vadd.f32 %v384, %v532
    %v541 = vadd.f32 %v193, %v533
    %v542 = vadd.f32 %v197, %v534
    %v543 = vadd.f32 %v203, %v535
    %v544 = vadd.f32 %v207, %v536
    %v545 = vadd.f32 %v213, %v537
    %v546 = vadd.f32 %v217, %v538
    %v547 = vadd.f32 %v223, %v539
    %v548 = vadd.f32 %v227, %v540
    %v549 = vld [vmem:[#allocation5 + $0xc0] sm:$0xf]
    %v550 = vld [vmem:[#allocation5 + $0xc8] sm:$0xf]
    %v551 = vld [vmem:[#allocation5 + $0xd0] sm:$0xf]
    %v552 = vld [vmem:[#allocation5 + $0xd8] sm:$0xf]
    %v553 = vld [vmem:[#allocation5 + $0xe0] sm:$0xf]
    %v554 = vld [vmem:[#allocation5 + $0xe8] sm:$0xf]
    %v555 = vld [vmem:[#allocation5 + $0xf0] sm:$0xf]
    %v556 = vld [vmem:[#allocation5 + $0xf8] sm:$0xf]
    %v557 = vld [vmem:[#allocation5 + $0x100] sm:$0xf]
    %v558 = vld [vmem:[#allocation5 + $0x108] sm:$0xf]
    %v559 = vld [vmem:[#allocation5 + $0x110] sm:$0xf]
    %v560 = vld [vmem:[#allocation5 + $0x118] sm:$0xf]
    %v561 = vld [vmem:[#allocation5 + $0x120] sm:$0xf]
    %v562 = vld [vmem:[#allocation5 + $0x128] sm:$0xf]
    %v563 = vld [vmem:[#allocation5 + $0x130] sm:$0xf]
    %v564 = vld [vmem:[#allocation5 + $0x138] sm:$0xf]
    %v565 = vld [vmem:[#allocation7 + $0x4] sm:$0x1]
    %v566 = vpack.c.bf16 %v542, %v541
    %v567 = vpack.c.bf16 %v544, %v543
    %v568 = vpack.c.bf16 %v546, %v545
    %v569 = vpack.c.bf16 %v548, %v547
    %v571 = vlaneseq
    %v572 = vshrl.u32 %v571, 7
    %v573 = vsub.s32 0, %v572
    %v574 = vrot.slane %v565, %v573
    %v592 = vunpack.c.l.b16 %v549
    %v593 = vunpack.c.l.b16 %v550
    %v594 = vunpack.c.l.b16 %v551
    %v595 = vunpack.c.l.b16 %v552
    %v596 = vunpack.c.l.b16 %v553
    %v597 = vunpack.c.l.b16 %v554
    %v598 = vunpack.c.l.b16 %v555
    %v599 = vunpack.c.l.b16 %v556
    %v600 = vunpack.c.l.b16 %v557
    %v601 = vunpack.c.l.b16 %v558
    %v602 = vunpack.c.l.b16 %v559
    %v603 = vunpack.c.l.b16 %v560
    %v604 = vunpack.c.l.b16 %v561
    %v605 = vunpack.c.l.b16 %v562
    %v606 = vunpack.c.l.b16 %v563
    %v607 = vunpack.c.l.b16 %v564
    %v608 = vpack.c.b16 %v593, %v592
    %v609 = vpack.c.b16 %v595, %v594
    %v610 = vpack.c.b16 %v597, %v596
    %v611 = vpack.c.b16 %v599, %v598
    %v612 = vpack.c.b16 %v601, %v600
    %v613 = vpack.c.b16 %v603, %v602
    %v614 = vpack.c.b16 %v605, %v604
    %v615 = vpack.c.b16 %v607, %v606
    %624 = vmatprep.subr.bf16.mxu0 0
    %625 = vmatpush1.bf16.msra.mxu0 %v615
    %626 = vmatprep.subr.bf16.mxu0 0
    %627 = vmatpush1.bf16.msra.mxu0 %v614
    %628 = vmatprep.subr.bf16.mxu0 0
    %629 = vmatpush1.bf16.msra.mxu0 %v613
    %630 = vmatprep.subr.bf16.mxu0 0
    %631 = vmatpush1.bf16.msra.mxu0 %v612
    %632 = vmatprep.subr.bf16.mxu0 0
    %633 = vmatpush1.bf16.msra.mxu0 %v611
    %634 = vmatprep.subr.bf16.mxu0 0
    %635 = vmatpush1.bf16.msra.mxu0 %v610
    %636 = vmatprep.subr.bf16.mxu0 0
    %637 = vmatpush1.bf16.msra.mxu0 %v609
    %638 = vmatprep.subr.bf16.mxu0 0
    %639 = vmatpush1.bf16.msra.mxu0 %v608
    %640 = vmatprep.subr.bf16.mxu0 0
    %641 = vmatpush2.bf16.msra.mxu0 0
    %642 = vmatprep.subr.bf16.mxu0 0
    %643 = vmatpush2.bf16.msra.mxu0 0
    %644 = vmatprep.subr.bf16.mxu0 0
    %645 = vmatpush2.bf16.msra.mxu0 0
    %646 = vmatprep.subr.bf16.mxu0 0
    %647 = vmatpush2.bf16.msra.mxu0 0
    %648 = vmatprep.subr.bf16.mxu0 0
    %649 = vmatpush2.bf16.msra.mxu0 0
    %650 = vmatprep.subr.bf16.mxu0 0
    %651 = vmatpush2.bf16.msra.mxu0 0
    %652 = vmatprep.subr.bf16.mxu0 0
    %653 = vmatpush2.bf16.msra.mxu0 0
    %654 = vmatprep.subr.bf16.mxu0 0
    %655 = vmatpush2.bf16.msra.mxu0 0
    %656 = vmatprep.mubr.bf16.mxu0 0
    %657 = vmatmul.mubr.bf16.gmra.mxu0 %v566
    %v658 = vpop.f32.mrf.mxu0
    %v659 = vadd.f32 %v574, %v658
    %v660 = vpop.f32.mrf.mxu0
    %v661 = vpop.f32.mrf.mxu0
    %v662 = vadd.f32 %v574, %v661
    %v663 = vpop.f32.mrf.mxu0
    %664 = vmatprep.mubr.bf16.mxu0 0
    %665 = vmatmul.mubr.bf16.gmra.mxu0 %v567
    %v666 = vpop.f32.mrf.mxu0
    %v667 = vadd.f32 %v574, %v666
    %v668 = vpop.f32.mrf.mxu0
    %v669 = vpop.f32.mrf.mxu0
    %v670 = vadd.f32 %v574, %v669
    %v671 = vpop.f32.mrf.mxu0
    %672 = vmatprep.mubr.bf16.mxu0 0
    %673 = vmatmul.mubr.bf16.gmra.mxu0 %v568
    %v674 = vpop.f32.mrf.mxu0
    %v675 = vadd.f32 %v574, %v674
    %v676 = vpop.f32.mrf.mxu0
    %v677 = vpop.f32.mrf.mxu0
    %v678 = vadd.f32 %v574, %v677
    %v679 = vpop.f32.mrf.mxu0
    %680 = vmatprep.mubr.bf16.mxu0 0
    %681 = vmatmul.mubr.bf16.gmra.mxu0 %v569
    %v682 = vpop.f32.mrf.mxu0
    %v683 = vadd.f32 %v574, %v682
    %v684 = vpop.f32.mrf.mxu0
    %v685 = vpop.f32.mrf.mxu0
    %v686 = vadd.f32 %v574, %v685
    %v687 = vpop.f32.mrf.mxu0
    %688 = vdwg.mxu0
    %v689 = vmax.f32 %v659, 0.0
    %v690 = vmax.f32 %v662, 0.0
    %v691 = vmax.f32 %v667, 0.0
    %v692 = vmax.f32 %v670, 0.0
    %v693 = vmax.f32 %v675, 0.0
    %v694 = vmax.f32 %v678, 0.0
    %v695 = vmax.f32 %v683, 0.0
    %v696 = vmax.f32 %v686, 0.0
    %v697 = vadd.f32 %v541, %v689
    %v698 = vadd.f32 %v542, %v690
    %v699 = vadd.f32 %v543, %v691
    %v700 = vadd.f32 %v544, %v692
    %v701 = vadd.f32 %v545, %v693
    %v702 = vadd.f32 %v546, %v694
    %v703 = vadd.f32 %v547, %v695
    %v704 = vadd.f32 %v548, %v696
    %v705 = vld [vmem:[#allocation5 + $0xc4] sm:$0xf]
    %v706 = vld [vmem:[#allocation5 + $0xcc] sm:$0xf]
    %v707 = vld [vmem:[#allocation5 + $0xd4] sm:$0xf]
    %v708 = vld [vmem:[#allocation5 + $0xdc] sm:$0xf]
    %v709 = vld [vmem:[#allocation5 + $0xe4] sm:$0xf]
    %v710 = vld [vmem:[#allocation5 + $0xec] sm:$0xf]
    %v711 = vld [vmem:[#allocation5 + $0xf4] sm:$0xf]
    %v712 = vld [vmem:[#allocation5 + $0xfc] sm:$0xf]
    %v713 = vld [vmem:[#allocation5 + $0x104] sm:$0xf]
    %v714 = vld [vmem:[#allocation5 + $0x10c] sm:$0xf]
    %v715 = vld [vmem:[#allocation5 + $0x114] sm:$0xf]
    %v716 = vld [vmem:[#allocation5 + $0x11c] sm:$0xf]
    %v717 = vld [vmem:[#allocation5 + $0x124] sm:$0xf]
    %v718 = vld [vmem:[#allocation5 + $0x12c] sm:$0xf]
    %v719 = vld [vmem:[#allocation5 + $0x134] sm:$0xf]
    %v720 = vld [vmem:[#allocation5 + $0x13c] sm:$0xf]
    %v721 = vld [vmem:[#allocation7 + $0x5] sm:$0x1]
    %v722 = vpack.c.bf16 %v698, %v697
    %v723 = vpack.c.bf16 %v700, %v699
    %v724 = vpack.c.bf16 %v702, %v701
    %v725 = vpack.c.bf16 %v704, %v703
    %v727 = vlaneseq
    %v728 = vshrl.u32 %v727, 7
    %v729 = vsub.s32 0, %v728
    %v730 = vrot.slane %v721, %v729
    %v748 = vunpack.c.l.b16 %v705
    %v749 = vunpack.c.l.b16 %v706
    %v750 = vunpack.c.l.b16 %v707
    %v751 = vunpack.c.l.b16 %v708
    %v752 = vunpack.c.l.b16 %v709
    %v753 = vunpack.c.l.b16 %v710
    %v754 = vunpack.c.l.b16 %v711
    %v755 = vunpack.c.l.b16 %v712
    %v756 = vunpack.c.l.b16 %v713
    %v757 = vunpack.c.l.b16 %v714
    %v758 = vunpack.c.l.b16 %v715
    %v759 = vunpack.c.l.b16 %v716
    %v760 = vunpack.c.l.b16 %v717
    %v761 = vunpack.c.l.b16 %v718
    %v762 = vunpack.c.l.b16 %v719
    %v763 = vunpack.c.l.b16 %v720
    %v764 = vpack.c.b16 %v749, %v748
    %v765 = vpack.c.b16 %v751, %v750
    %v766 = vpack.c.b16 %v753, %v752
    %v767 = vpack.c.b16 %v755, %v754
    %v768 = vpack.c.b16 %v757, %v756
    %v769 = vpack.c.b16 %v759, %v758
    %v770 = vpack.c.b16 %v761, %v760
    %v771 = vpack.c.b16 %v763, %v762
    %780 = vmatprep.subr.bf16.mxu0 0
    %781 = vmatpush1.bf16.msra.mxu0 %v771
    %782 = vmatprep.subr.bf16.mxu0 0
    %783 = vmatpush1.bf16.msra.mxu0 %v770
    %784 = vmatprep.subr.bf16.mxu0 0
    %785 = vmatpush1.bf16.msra.mxu0 %v769
    %786 = vmatprep.subr.bf16.mxu0 0
    %787 = vmatpush1.bf16.msra.mxu0 %v768
    %788 = vmatprep.subr.bf16.mxu0 0
    %789 = vmatpush1.bf16.msra.mxu0 %v767
    %790 = vmatprep.subr.bf16.mxu0 0
    %791 = vmatpush1.bf16.msra.mxu0 %v766
    %792 = vmatprep.subr.bf16.mxu0 0
    %793 = vmatpush1.bf16.msra.mxu0 %v765
    %794 = vmatprep.subr.bf16.mxu0 0
    %795 = vmatpush1.bf16.msra.mxu0 %v764
    %796 = vmatprep.subr.bf16.mxu0 0
    %797 = vmatpush2.bf16.msra.mxu0 0
    %798 = vmatprep.subr.bf16.mxu0 0
    %799 = vmatpush2.bf16.msra.mxu0 0
    %800 = vmatprep.subr.bf16.mxu0 0
    %801 = vmatpush2.bf16.msra.mxu0 0
    %802 = vmatprep.subr.bf16.mxu0 0
    %803 = vmatpush2.bf16.msra.mxu0 0
    %804 = vmatprep.subr.bf16.mxu0 0
    %805 = vmatpush2.bf16.msra.mxu0 0
    %806 = vmatprep.subr.bf16.mxu0 0
    %807 = vmatpush2.bf16.msra.mxu0 0
    %808 = vmatprep.subr.bf16.mxu0 0
    %809 = vmatpush2.bf16.msra.mxu0 0
    %810 = vmatprep.subr.bf16.mxu0 0
    %811 = vmatpush2.bf16.msra.mxu0 0
    %812 = vmatprep.mubr.bf16.mxu0 0
    %813 = vmatmul.mubr.bf16.gmra.mxu0 %v722
    %v814 = vpop.f32.mrf.mxu0
    %v815 = vadd.f32 %v730, %v814
    %v816 = vpop.f32.mrf.mxu0
    %v817 = vpop.f32.mrf.mxu0
    %v818 = vadd.f32 %v730, %v817
    %v819 = vpop.f32.mrf.mxu0
    %820 = vmatprep.mubr.bf16.mxu0 0
    %821 = vmatmul.mubr.bf16.gmra.mxu0 %v723
    %v822 = vpop.f32.mrf.mxu0
    %v823 = vadd.f32 %v730, %v822
    %v824 = vpop.f32.mrf.mxu0
    %v825 = vpop.f32.mrf.mxu0
    %v826 = vadd.f32 %v730, %v825
    %v827 = vpop.f32.mrf.mxu0
    %828 = vmatprep.mubr.bf16.mxu0 0
    %829 = vmatmul.mubr.bf16.gmra.mxu0 %v724
    %v830 = vpop.f32.mrf.mxu0
    %v831 = vadd.f32 %v730, %v830
    %v832 = vpop.f32.mrf.mxu0
    %v833 = vpop.f32.mrf.mxu0
    %v834 = vadd.f32 %v730, %v833
    %v835 = vpop.f32.mrf.mxu0
    %836 = vmatprep.mubr.bf16.mxu0 0
    %837 = vmatmul.mubr.bf16.gmra.mxu0 %v725
    %v838 = vpop.f32.mrf.mxu0
    %v839 = vadd.f32 %v730, %v838
    %v840 = vpop.f32.mrf.mxu0
    %v841 = vpop.f32.mrf.mxu0
    %v842 = vadd.f32 %v730, %v841
    %v843 = vpop.f32.mrf.mxu0
    %844 = vdwg.mxu0
    %v845 = vmax.f32 %v815, 0.0
    %v846 = vmax.f32 %v818, 0.0
    %v847 = vmax.f32 %v823, 0.0
    %v848 = vmax.f32 %v826, 0.0
    %v849 = vmax.f32 %v831, 0.0
    %v850 = vmax.f32 %v834, 0.0
    %v851 = vmax.f32 %v839, 0.0
    %v852 = vmax.f32 %v842, 0.0
    %v853 = vadd.f32 %v697, %v845
    %v854 = vadd.f32 %v698, %v846
    %v855 = vadd.f32 %v699, %v847
    %v856 = vadd.f32 %v700, %v848
    %v857 = vadd.f32 %v701, %v849
    %v858 = vadd.f32 %v702, %v850
    %v859 = vadd.f32 %v703, %v851
    %v860 = vadd.f32 %v704, %v852
    %v861 = vpack.c.bf16 %v854, %v853
    %v862 = vpack.c.bf16 %v856, %v855
    %v863 = vpack.c.bf16 %v858, %v857
    %v864 = vpack.c.bf16 %v860, %v859
    %v865 = vld [vmem:[#allocation5 + $0x140] sm:$0xf]
    %v866 = vld [vmem:[#allocation5 + $0x148] sm:$0xf]
    %v867 = vld [vmem:[#allocation5 + $0x150] sm:$0xf]
    %v868 = vld [vmem:[#allocation5 + $0x158] sm:$0xf]
    %v869 = vld [vmem:[#allocation5 + $0x160] sm:$0xf]
    %v870 = vld [vmem:[#allocation5 + $0x168] sm:$0xf]
    %v871 = vld [vmem:[#allocation5 + $0x170] sm:$0xf]
    %v872 = vld [vmem:[#allocation5 + $0x178] sm:$0xf]
    %v873 = vld [vmem:[#allocation5 + $0x180] sm:$0xf]
    %v874 = vld [vmem:[#allocation5 + $0x188] sm:$0xf]
    %v875 = vld [vmem:[#allocation5 + $0x190] sm:$0xf]
    %v876 = vld [vmem:[#allocation5 + $0x198] sm:$0xf]
    %v877 = vld [vmem:[#allocation5 + $0x1a0] sm:$0xf]
    %v878 = vld [vmem:[#allocation5 + $0x1a8] sm:$0xf]
    %v879 = vld [vmem:[#allocation5 + $0x1b0] sm:$0xf]
    %v880 = vld [vmem:[#allocation5 + $0x1b8] sm:$0xf]
    %v881 = vld [vmem:[#allocation7 + $0x6] sm:$0x1]
    %v883 = vlaneseq
    %v884 = vshrl.u32 %v883, 7
    %v885 = vsub.s32 0, %v884
    %v886 = vrot.slane %v881, %v885
    %v904 = vunpack.c.l.b16 %v865
    %v905 = vunpack.c.l.b16 %v866
    %v906 = vunpack.c.l.b16 %v867
    %v907 = vunpack.c.l.b16 %v868
    %v908 = vunpack.c.l.b16 %v869
    %v909 = vunpack.c.l.b16 %v870
    %v910 = vunpack.c.l.b16 %v871
    %v911 = vunpack.c.l.b16 %v872
    %v912 = vunpack.c.l.b16 %v873
    %v913 = vunpack.c.l.b16 %v874
    %v914 = vunpack.c.l.b16 %v875
    %v915 = vunpack.c.l.b16 %v876
    %v916 = vunpack.c.l.b16 %v877
    %v917 = vunpack.c.l.b16 %v878
    %v918 = vunpack.c.l.b16 %v879
    %v919 = vunpack.c.l.b16 %v880
    %v920 = vpack.c.b16 %v905, %v904
    %v921 = vpack.c.b16 %v907, %v906
    %v922 = vpack.c.b16 %v909, %v908
    %v923 = vpack.c.b16 %v911, %v910
    %v924 = vpack.c.b16 %v913, %v912
    %v925 = vpack.c.b16 %v915, %v914
    %v926 = vpack.c.b16 %v917, %v916
    %v927 = vpack.c.b16 %v919, %v918
    %936 = vmatprep.subr.bf16.mxu0 0
    %937 = vmatpush1.bf16.msra.mxu0 %v927
    %938 = vmatprep.subr.bf16.mxu0 0
    %939 = vmatpush1.bf16.msra.mxu0 %v926
    %940 = vmatprep.subr.bf16.mxu0 0
    %941 = vmatpush1.bf16.msra.mxu0 %v925
    %942 = vmatprep.subr.bf16.mxu0 0
    %943 = vmatpush1.bf16.msra.mxu0 %v924
    %944 = vmatprep.subr.bf16.mxu0 0
    %945 = vmatpush1.bf16.msra.mxu0 %v923
    %946 = vmatprep.subr.bf16.mxu0 0
    %947 = vmatpush1.bf16.msra.mxu0 %v922
    %948 = vmatprep.subr.bf16.mxu0 0
    %949 = vmatpush1.bf16.msra.mxu0 %v921
    %950 = vmatprep.subr.bf16.mxu0 0
    %951 = vmatpush1.bf16.msra.mxu0 %v920
    %952 = vmatprep.subr.bf16.mxu0 0
    %953 = vmatpush2.bf16.msra.mxu0 0
    %954 = vmatprep.subr.bf16.mxu0 0
    %955 = vmatpush2.bf16.msra.mxu0 0
    %956 = vmatprep.subr.bf16.mxu0 0
    %957 = vmatpush2.bf16.msra.mxu0 0
    %958 = vmatprep.subr.bf16.mxu0 0
    %959 = vmatpush2.bf16.msra.mxu0 0
    %960 = vmatprep.subr.bf16.mxu0 0
    %961 = vmatpush2.bf16.msra.mxu0 0
    %962 = vmatprep.subr.bf16.mxu0 0
    %963 = vmatpush2.bf16.msra.mxu0 0
    %964 = vmatprep.subr.bf16.mxu0 0
    %965 = vmatpush2.bf16.msra.mxu0 0
    %966 = vmatprep.subr.bf16.mxu0 0
    %967 = vmatpush2.bf16.msra.mxu0 0
    %968 = vmatprep.mubr.bf16.mxu0 0
    %969 = vmatmul.mubr.bf16.gmra.mxu0 %v861
    %v970 = vpop.f32.mrf.mxu0
    %v971 = vadd.f32 %v886, %v970
    %v972 = vpop.f32.mrf.mxu0
    %v973 = vpop.f32.mrf.mxu0
    %v974 = vadd.f32 %v886, %v973
    %v975 = vpop.f32.mrf.mxu0
    %976 = vmatprep.mubr.bf16.mxu0 0
    %977 = vmatmul.mubr.bf16.gmra.mxu0 %v862
    %v978 = vpop.f32.mrf.mxu0
    %v979 = vadd.f32 %v886, %v978
    %v980 = vpop.f32.mrf.mxu0
    %v981 = vpop.f32.mrf.mxu0
    %v982 = vadd.f32 %v886, %v981
    %v983 = vpop.f32.mrf.mxu0
    %984 = vmatprep.mubr.bf16.mxu0 0
    %985 = vmatmul.mubr.bf16.gmra.mxu0 %v863
    %v986 = vpop.f32.mrf.mxu0
    %v987 = vadd.f32 %v886, %v986
    %v988 = vpop.f32.mrf.mxu0
    %v989 = vpop.f32.mrf.mxu0
    %v990 = vadd.f32 %v886, %v989
    %v991 = vpop.f32.mrf.mxu0
    %992 = vmatprep.mubr.bf16.mxu0 0
    %993 = vmatmul.mubr.bf16.gmra.mxu0 %v864
    %v994 = vpop.f32.mrf.mxu0
    %v995 = vadd.f32 %v886, %v994
    %v996 = vpop.f32.mrf.mxu0
    %v997 = vpop.f32.mrf.mxu0
    %v998 = vadd.f32 %v886, %v997
    %v999 = vpop.f32.mrf.mxu0
    %1000 = vdwg.mxu0
    %1001 = vst [vmem:[#allocation8] sm:$0xff] %v971
    %1002 = vst [vmem:[#allocation8 + $0x8] sm:$0xff] %v974
    %1003 = vst [vmem:[#allocation8 + $0x10] sm:$0xff] %v979
    %1004 = vst [vmem:[#allocation8 + $0x18] sm:$0xff] %v982
    %1005 = vst [vmem:[#allocation8 + $0x20] sm:$0xff] %v987
    %1006 = vst [vmem:[#allocation8 + $0x28] sm:$0xff] %v990
    %1007 = vst [vmem:[#allocation8 + $0x30] sm:$0xff] %v995
    %1008 = vst [vmem:[#allocation8 + $0x38] sm:$0xff] %v998
    // Predicated region
    $region26: #{tpu_custom_call.1} parent=1 // pred_check
      _
    $region27: #{tpu_custom_call.1} parent=1 // pred_check_branch
      %1010 = sbr.rel (0) target = $region29
    $region28: #{tpu_custom_call.1} parent=1 // pred_region
      %s1012 = ssub.s32 1024, 1024
      %1013 = vsyncadd [#allocation4], %s1012
      %s1014 = sshll.u32 [#allocation8], 4
      %s1015 = int_to_ptr.vmem [resolvable:$true] %s1014
      %1020 = dma.vmem_to_hbm [thread:$0]  %s1015, 1024, %s3, [#allocation4], 128, 128, 8
    $region29: #{tpu_custom_call.1} parent=1 // pred_fallthru
      _
    // Predicated region
    $region30: #{tpu_custom_call.1} parent=1 // pred_check
      _
    $region31: #{tpu_custom_call.1} parent=1 // pred_check_branch
      %1022 = sbr.rel (0) target = $region33
    $region32: #{tpu_custom_call.1} parent=1 // pred_region
      %1023 = dma.done [#allocation4], 1024
    $region33: #{tpu_custom_call.1} parent=1 // pred_fallthru
      _
    %1024 = vsyncpa [#allocation3], 1
    %1025 = vsyncpa [#allocation6], 1
    %1026 = vsyncpa [#allocation4], 1

</llo_original>
